<compile_context>
chip_gen: v7x
topology: tpu7x:2x2x1
jax: 0.10.0
libtpu: 0.0.40
codegen_flags: <defaults>
</compile_context>

<pallas_src>
import functools

import jax
import jax.numpy as jnp
import numpy as np
from jax.experimental import pallas as pl
from jax.experimental.pallas import tpu as pltpu

METRIC_NAMES = ('de:abs_rel', 'de:sq_rel', 'de:rms', 'de:log_rms',
                'da:a1', 'da:a2', 'da:a3')

_LANE = 128
_SUB = 8


def _round_up(x, m):
    return (x + m - 1) // m * m


# ----------------------------------------------------------------------------
# Pallas kernel: median-scaling + clamp + masked compute_errors, N-tiled.
# ----------------------------------------------------------------------------
def _depth_metrics_kernel(min_depth, max_depth, inv_b,
                          scale_ref, gt_ref, pd_ref, v_ref, out_ref, acc_ref):
    """scale_ref: SMEM (B,) f32 per-batch median scale.
    gt_ref/pd_ref/v_ref: VMEM (B, TR, 128) f32 blocks of one N-chunk.
    out_ref: VMEM (8, 128) f32; row m = metric m broadcast across lanes.
    acc_ref: VMEM (B, 8, 128) f32 scratch; per-batch per-metric lane partials."""
    step = pl.program_id(0)
    B = gt_ref.shape[0]

    @pl.when(step == 0)
    def _():
        acc_ref[...] = jnp.zeros_like(acc_ref)

    # Static unroll over the (small) batch dim: each slab is a full (TR, 128)
    # tile with full sublane/lane occupancy.
    for b in range(B):
        gt_raw = gt_ref[b]                      # (TR, 128)
        pd_raw = pd_ref[b]
        v = v_ref[b]                            # 0/1 validity (0 on padding)
        scale_b = scale_ref[b]                  # scalar read from SMEM

        # d_pd *= median(d_gt)/median(d_pd); torch.clamp(d_pd, min, max)
        pd_scaled = jnp.clip(pd_raw * scale_b, min_depth, max_depth)

        # Invalid / padded points -> gt = pd = 1 exactly, so every diff/log
        # term below is exactly 0 without an extra mask multiply; only the
        # threshold indicators and the count need masking with v.
        ok = v > 0.5
        gt = jnp.where(ok, gt_raw, 1.0)
        pd = jnp.where(ok, pd_scaled, 1.0)

        # Exact reciprocals (shared by thresh / abs_rel / sq_rel).  The
        # a1/a2/a3 threshold compares are tolerance-sensitive, so no
        # approx-reciprocal on the per-point path.
        inv_gt = 1.0 / gt
        inv_pd = 1.0 / pd
        ratio = gt * inv_pd
        thresh = jnp.maximum(ratio, pd * inv_gt)
        diff = gt - pd
        diff2 = diff * diff
        dlog = jnp.log(ratio)                   # log(gt) - log(pd)

        # Sublane-only reductions (cheap); the 128-wide lane reduce is
        # deferred to the finalize step.
        partials = [
            jnp.sum(jnp.abs(diff) * inv_gt, axis=0, keepdims=True),   # abs_rel
            jnp.sum(diff2 * inv_gt, axis=0, keepdims=True),           # sq_rel
            jnp.sum(diff2, axis=0, keepdims=True),                    # rms^2
            jnp.sum(dlog * dlog, axis=0, keepdims=True),              # log_rms^2
            jnp.sum(jnp.where(thresh < 1.25, v, 0.0), axis=0, keepdims=True),
            jnp.sum(jnp.where(thresh < 1.25 ** 2, v, 0.0), axis=0, keepdims=True),
            jnp.sum(jnp.where(thresh < 1.25 ** 3, v, 0.0), axis=0, keepdims=True),
            jnp.sum(v, axis=0, keepdims=True),                        # count
        ]
        acc_ref[b] += jnp.concatenate(partials, axis=0)               # (8, 128)

    @pl.when(step == pl.num_programs(0) - 1)
    def _():
        acc = acc_ref[...]                                    # (B, 8, 128)
        sums = jnp.sum(acc, axis=-1, keepdims=True)           # (B, 8, 1)
        # TODO(synk): zero-valid batches contribute 0 here (torch reference
        # would produce NaN from a mean over an empty set).
        cnt = jnp.maximum(sums[:, 7:8, :], 1.0)               # (B, 1, 1)
        means = sums * (1.0 / cnt)                            # exact reciprocal
        ridx = jax.lax.broadcasted_iota(jnp.int32, means.shape, 1)
        per_batch = jnp.where((ridx == 2) | (ridx == 3), jnp.sqrt(means), means)
        batch_mean = jnp.sum(per_batch, axis=0) * inv_b       # (8, 1)
        out_ref[...] = jnp.broadcast_to(batch_mean, out_ref.shape)   # one store


# ----------------------------------------------------------------------------
# Plain-JAX glue (indexing / gather / median) identical in semantics to torch.
# ----------------------------------------------------------------------------
def _valid_mask(depth_g, depth_valid, dim_f, img_bound, min_depth, max_depth):
    gt_h, gt_w = dim_f[0], dim_f[1]
    up = jnp.floor(img_bound[0] * gt_h)      # int() truncation, positive vals
    down = jnp.floor(img_bound[1] * gt_h)
    left = jnp.floor(img_bound[2] * gt_w)
    right = jnp.floor(img_bound[3] * gt_w)
    r, c, d = depth_g[:, 0], depth_g[:, 1], depth_g[:, 2]
    return (depth_valid & (r >= up) & (r < down) & (c >= left) & (c < right)
            & (d > min_depth) & (d < max_depth))


def _sample_inv_depth(disp, rows, cols, dim_f):
    # Bilinear sample of disp (h, w) at integer target pixel (rows, cols) of a
    # (gt_h, gt_w) grid with align_corners=False — identical to gathering from
    # 1 / F.interpolate(disp[None, None], (gt_h, gt_w), 'bilinear').
    h, w = disp.shape
    gt_h, gt_w = dim_f[0], dim_f[1]
    sx = jnp.maximum((rows + 0.5) * (h / gt_h) - 0.5, 0.0)
    sy = jnp.maximum((cols + 0.5) * (w / gt_w) - 0.5, 0.0)
    x0f, y0f = jnp.floor(sx), jnp.floor(sy)
    wx, wy = sx - x0f, sy - y0f
    x0 = jnp.clip(x0f.astype(jnp.int32), 0, h - 1)
    y0 = jnp.clip(y0f.astype(jnp.int32), 0, w - 1)
    x1 = jnp.minimum(x0 + 1, h - 1)
    y1 = jnp.minimum(y0 + 1, w - 1)
    d00, d01 = disp[x0, y0], disp[x0, y1]
    d10, d11 = disp[x1, y0], disp[x1, y1]
    dval = ((1 - wx) * (1 - wy) * d00 + (1 - wx) * wy * d01
            + wx * (1 - wy) * d10 + wx * wy * d11)
    return 1.0 / dval


def _masked_lower_median(x, valid):
    # torch.median returns the lower of the two middle values for even counts.
    srt = jnp.sort(jnp.where(valid, x, jnp.inf))
    cnt = jnp.sum(valid.astype(jnp.int32))
    idx = jnp.maximum((cnt - 1) // 2, 0)
    return jnp.take(srt, idx)


def depth_metrics(disp_pred, depth_gt, depth_valid, gt_dim,
                  img_bound, min_depth, max_depth):
    # TODO(synk): the optional `mask` branch (per-label metrics over a dynamic
    # label set with data-dependent counts) has no clean static-shape Pallas
    # equivalent; only the mask=None path is implemented.
    B = disp_pred.shape[0]
    N = depth_gt.shape[1]
    dim_f = gt_dim.astype(jnp.float32)

    valid = jax.vmap(functools.partial(_valid_mask, img_bound=img_bound,
                                       min_depth=min_depth,
                                       max_depth=max_depth))(
        depth_gt, depth_valid, dim_f)
    d_pd_raw = jax.vmap(_sample_inv_depth)(disp_pred[:, 0],
                                           depth_gt[:, :, 0],
                                           depth_gt[:, :, 1], dim_f)
    d_gt = depth_gt[:, :, 2]

    # torch.median-based scale (dynamic-length median stays in XLA).
    # Sanitized for zero-valid batches so no NaN/inf reaches kernel math.
    med_gt = jax.vmap(_masked_lower_median)(d_gt, valid)
    med_pd = jax.vmap(_masked_lower_median)(d_pd_raw, valid)
    has_valid = jnp.any(valid, axis=1)
    scale = jnp.where(has_valid, med_gt / med_pd, 1.0).astype(jnp.float32)  # (B,)

    # Layout/tiling: per batch the N points become (rows, 128) lane-major with
    # rows a multiple of 8 (full sublane occupancy), chunked along rows by TR
    # per grid step so per-step VMEM stays bounded on every generation.
    rows = _round_up(N, _LANE) // _LANE
    cap = max(_SUB, ((1 << 20) // (B * _LANE * 4)) // _SUB * _SUB)  # ~1 MiB/block
    tr = min(_round_up(rows, _SUB), cap)
    rows_p = _round_up(rows, tr)
    steps = rows_p // tr
    n_pad = rows_p * _LANE

    def prep(x):
        x = x.astype(jnp.float32)
        if n_pad != N:
            x = jnp.pad(x, ((0, 0), (0, n_pad - N)))   # padding has valid=0
        return x.reshape(B, rows_p, _LANE)

    gt_r = prep(d_gt)
    pd_r = prep(d_pd_raw)
    v_r = prep(valid)

    kernel = functools.partial(_depth_metrics_kernel,
                               float(min_depth), float(max_depth), 1.0 / B)

    out = pl.pallas_call(
        kernel,
        out_shape=jax.ShapeDtypeStruct((8, _LANE), jnp.float32),  # lane-dense
        grid=(steps,),
        in_specs=[
            pl.BlockSpec(memory_space=pltpu.MemorySpace.SMEM),    # scale (B,)
            pl.BlockSpec((B, tr, _LANE), lambda j: (0, j, 0)),    # gt depth
            pl.BlockSpec((B, tr, _LANE), lambda j: (0, j, 0)),    # pred depth
            pl.BlockSpec((B, tr, _LANE), lambda j: (0, j, 0)),    # valid 0/1
        ],
        out_specs=pl.BlockSpec((8, _LANE), lambda j: (0, 0)),
        scratch_shapes=[pltpu.VMEM((B, 8, _LANE), jnp.float32)],
        compiler_params=pltpu.CompilerParams(
            dimension_semantics=("arbitrary",)),   # reduction axis (accumulator)
    )(scale, gt_r, pd_r, v_r)

    vals = out[:7, 0]
    return {name: vals[i] for i, name in enumerate(METRIC_NAMES)}


# Single jit so the surrounding glue (mask, gather, medians, pad/reshape)
# compiles into one XLA program around the kernel.
depth_metrics_jit = jax.jit(
    depth_metrics, static_argnames=("img_bound", "min_depth", "max_depth"))


# ----------------------------------------------------------------------------
# Pure numpy/JAX reference (same glue, dense loop over valid points).
# ----------------------------------------------------------------------------
def _reference_metrics(disp_pred, depth_gt, depth_valid, gt_dim,
                       img_bound, min_depth, max_depth):
    B = depth_gt.shape[0]
    dim_f = gt_dim.astype(jnp.float32)
    valid = jax.vmap(functools.partial(_valid_mask, img_bound=img_bound,
                                       min_depth=min_depth,
                                       max_depth=max_depth))(
        depth_gt, depth_valid, dim_f)
    d_pd_raw = jax.vmap(_sample_inv_depth)(disp_pred[:, 0],
                                           depth_gt[:, :, 0],
                                           depth_gt[:, :, 1], dim_f)
    d_gt = depth_gt[:, :, 2]
    med_gt = jax.vmap(_masked_lower_median)(d_gt, valid)
    med_pd = jax.vmap(_masked_lower_median)(d_pd_raw, valid)

    acc = np.zeros(7, np.float64)
    for b in range(B):
        v = np.asarray(valid[b])
        g = np.asarray(d_gt[b])[v].astype(np.float64)
        p = np.asarray(d_pd_raw[b])[v].astype(np.float64)
        p = np.clip(p * float(med_gt[b] / med_pd[b]), min_depth, max_depth)
        thresh = np.maximum(g / p, p / g)
        acc[0] += np.mean(np.abs(g - p) / g)
        acc[1] += np.mean((g - p) ** 2 / g)
        acc[2] += np.sqrt(np.mean((g - p) ** 2))
        acc[3] += np.sqrt(np.mean((np.log(g) - np.log(p)) ** 2))
        acc[4] += np.mean(thresh < 1.25)
        acc[5] += np.mean(thresh < 1.25 ** 2)
        acc[6] += np.mean(thresh < 1.25 ** 3)
    return acc / B


if __name__ == "__main__":
    # Module "parameters" (config constants; no learnable weights in __init__).
    img_bound = (0.10, 0.95, 0.05, 0.95)
    min_depth, max_depth = 0.1, 80.0

    B, N = 2, 256          # batch, number of sparse GT points
    h, w = 16, 24          # predicted disparity resolution
    GT_H, GT_W = 64, 96    # ground-truth image resolution

    key = jax.random.PRNGKey(0)
    k1, k2, k3, k4, k5 = jax.random.split(key, 5)
    rows = jnp.floor(jax.random.uniform(k1, (B, N), minval=0.0, maxval=GT_H))
    cols = jnp.floor(jax.random.uniform(k2, (B, N), minval=0.0, maxval=GT_W))
    deps = jax.random.uniform(k3, (B, N), minval=0.05, maxval=90.0)
    depth_gt = jnp.stack([rows, cols, deps], axis=-1).astype(jnp.float32)
    depth_valid = jax.random.uniform(k4, (B, N)) < 0.9
    gt_dim = jnp.array([[GT_H, GT_W], [GT_H, GT_W]], dtype=jnp.int32)
    disp_pred = jax.random.uniform(k5, (B, 1, h, w),
                                   minval=0.02, maxval=0.5).astype(jnp.float32)

    metrics = depth_metrics_jit(disp_pred, depth_gt, depth_valid, gt_dim,
                                img_bound=img_bound, min_depth=min_depth,
                                max_depth=max_depth)
    metrics = {k: jax.block_until_ready(v) for k, v in metrics.items()}

    got = np.array([float(metrics[n]) for n in METRIC_NAMES])
    ref = _reference_metrics(disp_pred, depth_gt, depth_valid, gt_dim,
                             img_bound, min_depth, max_depth)
    assert np.all(np.isfinite(got)), got
    assert np.allclose(got, ref, rtol=1e-3, atol=1e-4), (got, ref)
    print("KERNEL_OK")
</pallas_src>

<mosaic_0001>
module attributes {stable_mosaic.version = 11 : i64} {
  func.func @_depth_metrics_kernel(%arg0: i32, %arg1: memref<2xf32, #tpu.memory_space<smem>>, %arg2: memref<2x8x128xf32, #tpu.memory_space<vmem>>, %arg3: memref<2x8x128xf32, #tpu.memory_space<vmem>>, %arg4: memref<2x8x128xf32, #tpu.memory_space<vmem>>, %arg5: memref<8x128xf32, #tpu.memory_space<vmem>>, %arg6: memref<2x8x128xf32, #tpu.memory_space<vmem>>) attributes {dimension_semantics = [#tpu.dimension_semantics<arbitrary>], iteration_bounds = array<i64: 1>, scalar_prefetch = 0 : i64, scratch_operands = 1 : i64, tpu.core_type = #tpu.core_type<tc>, window_params = [{transform_indices = @transform_0, window_bounds = array<i64: 2>}, {transform_indices = @transform_1, window_bounds = array<i64: 2, 8, 128>}, {transform_indices = @transform_2, window_bounds = array<i64: 2, 8, 128>}, {transform_indices = @transform_3, window_bounds = array<i64: 2, 8, 128>}, {pipeline_mode = #tpu.pipeline_mode<synchronous>, transform_indices = @transform_4, window_bounds = array<i64: 8, 128>}]} {
    %c0_i32 = arith.constant 0 : i32
    %0 = arith.cmpi eq, %arg0, %c0_i32 : i32
    %1 = arith.extui %0 : i1 to i32
    %c0_i32_0 = arith.constant 0 : i32
    %2 = arith.cmpi ne, %1, %c0_i32_0 : i32
    scf.if %2 {
      %cst_74 = arith.constant 0.000000e+00 : f32
      %142 = vector.broadcast %cst_74 : f32 to vector<2x8x128xf32>
      %c0_75 = arith.constant 0 : index
      %c0_76 = arith.constant 0 : index
      %c0_77 = arith.constant 0 : index
      %143 = vector.load %arg6[%c0_75, %c0_76, %c0_77] : memref<2x8x128xf32, #tpu.memory_space<vmem>>, vector<2x8x128xf32>
      tpu.vector_store %arg6[%c0_75, %c0_76, %c0_77], %142 {strides = array<i32>} : memref<2x8x128xf32, #tpu.memory_space<vmem>>, vector<2x8x128xf32>,
    } else {
    }
    %c0 = arith.constant 0 : index
    %c0_1 = arith.constant 0 : index
    %c0_2 = arith.constant 0 : index
    %3 = vector.load %arg2[%c0, %c0_1, %c0_2] : memref<2x8x128xf32, #tpu.memory_space<vmem>>, vector<1x8x128xf32>
    %4 = vector.shape_cast %3 : vector<1x8x128xf32> to vector<8x128xf32>
    %c0_3 = arith.constant 0 : index
    %c0_4 = arith.constant 0 : index
    %c0_5 = arith.constant 0 : index
    %5 = vector.load %arg3[%c0_3, %c0_4, %c0_5] : memref<2x8x128xf32, #tpu.memory_space<vmem>>, vector<1x8x128xf32>
    %6 = vector.shape_cast %5 : vector<1x8x128xf32> to vector<8x128xf32>
    %c0_6 = arith.constant 0 : index
    %c0_7 = arith.constant 0 : index
    %c0_8 = arith.constant 0 : index
    %7 = vector.load %arg4[%c0_6, %c0_7, %c0_8] : memref<2x8x128xf32, #tpu.memory_space<vmem>>, vector<1x8x128xf32>
    %8 = vector.shape_cast %7 : vector<1x8x128xf32> to vector<8x128xf32>
    %c0_9 = arith.constant 0 : index
    %9 = memref.load %arg1[%c0_9] : memref<2xf32, #tpu.memory_space<smem>>
    %10 = vector.broadcast %9 : f32 to vector<8x128xf32>
    %11 = arith.mulf %6, %10 : vector<8x128xf32>
    %cst = arith.constant 1.000000e-01 : f32
    %cst_10 = arith.constant 8.000000e+01 : f32
    %12 = vector.broadcast %cst : f32 to vector<8x128xf32>
    %13 = arith.maximumf %12, %11 : vector<8x128xf32>
    %14 = vector.broadcast %cst_10 : f32 to vector<8x128xf32>
    %15 = arith.minimumf %14, %13 : vector<8x128xf32>
    %cst_11 = arith.constant 5.000000e-01 : f32
    %16 = vector.broadcast %cst_11 : f32 to vector<8x128xf32>
    %17 = arith.cmpf ogt, %8, %16 : vector<8x128xf32>
    %cst_12 = arith.constant 1.000000e+00 : f32
    %18 = vector.broadcast %cst_12 : f32 to vector<8x128xf32>
    %19 = arith.select %17, %4, %18 : vector<8x128xi1>, vector<8x128xf32>
    %cst_13 = arith.constant 1.000000e+00 : f32
    %20 = vector.broadcast %cst_13 : f32 to vector<8x128xf32>
    %21 = arith.select %17, %15, %20 : vector<8x128xi1>, vector<8x128xf32>
    %cst_14 = arith.constant 1.000000e+00 : f32
    %22 = vector.broadcast %cst_14 : f32 to vector<8x128xf32>
    %23 = arith.divf %22, %19 : vector<8x128xf32>
    %cst_15 = arith.constant 1.000000e+00 : f32
    %24 = vector.broadcast %cst_15 : f32 to vector<8x128xf32>
    %25 = arith.divf %24, %21 : vector<8x128xf32>
    %26 = arith.mulf %19, %25 : vector<8x128xf32>
    %27 = arith.mulf %21, %23 : vector<8x128xf32>
    %28 = arith.maximumf %26, %27 : vector<8x128xf32>
    %29 = arith.subf %19, %21 : vector<8x128xf32>
    %30 = arith.mulf %29, %29 : vector<8x128xf32>
    %31 = math.log %26 : vector<8x128xf32>
    %32 = math.absf %29 : vector<8x128xf32>
    %33 = arith.mulf %32, %23 : vector<8x128xf32>
    %cst_16 = arith.constant dense<0.000000e+00> : vector<128xf32>
    %34 = vector.multi_reduction <add>, %33, %cst_16 [0] : vector<8x128xf32> to vector<128xf32>
    %35 = vector.shape_cast %34 : vector<128xf32> to vector<1x128xf32>
    %36 = arith.mulf %30, %23 : vector<8x128xf32>
    %cst_17 = arith.constant dense<0.000000e+00> : vector<128xf32>
    %37 = vector.multi_reduction <add>, %36, %cst_17 [0] : vector<8x128xf32> to vector<128xf32>
    %38 = vector.shape_cast %37 : vector<128xf32> to vector<1x128xf32>
    %cst_18 = arith.constant dense<0.000000e+00> : vector<128xf32>
    %39 = vector.multi_reduction <add>, %30, %cst_18 [0] : vector<8x128xf32> to vector<128xf32>
    %40 = vector.shape_cast %39 : vector<128xf32> to vector<1x128xf32>
    %41 = arith.mulf %31, %31 : vector<8x128xf32>
    %cst_19 = arith.constant dense<0.000000e+00> : vector<128xf32>
    %42 = vector.multi_reduction <add>, %41, %cst_19 [0] : vector<8x128xf32> to vector<128xf32>
    %43 = vector.shape_cast %42 : vector<128xf32> to vector<1x128xf32>
    %cst_20 = arith.constant 1.250000e+00 : f32
    %44 = vector.broadcast %cst_20 : f32 to vector<8x128xf32>
    %45 = arith.cmpf olt, %28, %44 : vector<8x128xf32>
    %cst_21 = arith.constant 0.000000e+00 : f32
    %46 = vector.broadcast %cst_21 : f32 to vector<8x128xf32>
    %47 = arith.select %45, %8, %46 : vector<8x128xi1>, vector<8x128xf32>
    %cst_22 = arith.constant dense<0.000000e+00> : vector<128xf32>
    %48 = vector.multi_reduction <add>, %47, %cst_22 [0] : vector<8x128xf32> to vector<128xf32>
    %49 = vector.shape_cast %48 : vector<128xf32> to vector<1x128xf32>
    %cst_23 = arith.constant 1.562500e+00 : f32
    %50 = vector.broadcast %cst_23 : f32 to vector<8x128xf32>
    %51 = arith.cmpf olt, %28, %50 : vector<8x128xf32>
    %cst_24 = arith.constant 0.000000e+00 : f32
    %52 = vector.broadcast %cst_24 : f32 to vector<8x128xf32>
    %53 = arith.select %51, %8, %52 : vector<8x128xi1>, vector<8x128xf32>
    %cst_25 = arith.constant dense<0.000000e+00> : vector<128xf32>
    %54 = vector.multi_reduction <add>, %53, %cst_25 [0] : vector<8x128xf32> to vector<128xf32>
    %55 = vector.shape_cast %54 : vector<128xf32> to vector<1x128xf32>
    %cst_26 = arith.constant 1.953125 : f32
    %56 = vector.broadcast %cst_26 : f32 to vector<8x128xf32>
    %57 = arith.cmpf olt, %28, %56 : vector<8x128xf32>
    %cst_27 = arith.constant 0.000000e+00 : f32
    %58 = vector.broadcast %cst_27 : f32 to vector<8x128xf32>
    %59 = arith.select %57, %8, %58 : vector<8x128xi1>, vector<8x128xf32>
    %cst_28 = arith.constant dense<0.000000e+00> : vector<128xf32>
    %60 = vector.multi_reduction <add>, %59, %cst_28 [0] : vector<8x128xf32> to vector<128xf32>
    %61 = vector.shape_cast %60 : vector<128xf32> to vector<1x128xf32>
    %cst_29 = arith.constant dense<0.000000e+00> : vector<128xf32>
    %62 = vector.multi_reduction <add>, %8, %cst_29 [0] : vector<8x128xf32> to vector<128xf32>
    %63 = vector.shape_cast %62 : vector<128xf32> to vector<1x128xf32>
    %c0_30 = arith.constant 0 : index
    %c0_31 = arith.constant 0 : index
    %c0_32 = arith.constant 0 : index
    %64 = vector.load %arg6[%c0_30, %c0_31, %c0_32] : memref<2x8x128xf32, #tpu.memory_space<vmem>>, vector<1x8x128xf32>
    %65 = vector.shape_cast %64 : vector<1x8x128xf32> to vector<8x128xf32>
    %66 = tpu.concatenate %35, %38, %40, %43, %49, %55, %61, %63 in 0 : vector<1x128xf32>, vector<1x128xf32>, vector<1x128xf32>, vector<1x128xf32>, vector<1x128xf32>, vector<1x128xf32>, vector<1x128xf32>, vector<1x128xf32> -> vector<8x128xf32>
    %67 = arith.addf %65, %66 : vector<8x128xf32>
    %c0_33 = arith.constant 0 : index
    %c0_34 = arith.constant 0 : index
    %c0_35 = arith.constant 0 : index
    %68 = vector.load %arg6[%c0_33, %c0_34, %c0_35] : memref<2x8x128xf32, #tpu.memory_space<vmem>>, vector<1x8x128xf32>
    %69 = vector.shape_cast %68 : vector<1x8x128xf32> to vector<8x128xf32>
    %70 = vector.shape_cast %67 : vector<8x128xf32> to vector<1x8x128xf32>
    tpu.vector_store %arg6[%c0_33, %c0_34, %c0_35], %70 {strides = array<i32>} : memref<2x8x128xf32, #tpu.memory_space<vmem>>, vector<1x8x128xf32>,
    %c1 = arith.constant 1 : index
    %c0_36 = arith.constant 0 : index
    %c0_37 = arith.constant 0 : index
    %71 = vector.load %arg2[%c1, %c0_36, %c0_37] : memref<2x8x128xf32, #tpu.memory_space<vmem>>, vector<1x8x128xf32>
    %72 = vector.shape_cast %71 : vector<1x8x128xf32> to vector<8x128xf32>
    %c1_38 = arith.constant 1 : index
    %c0_39 = arith.constant 0 : index
    %c0_40 = arith.constant 0 : index
    %73 = vector.load %arg3[%c1_38, %c0_39, %c0_40] : memref<2x8x128xf32, #tpu.memory_space<vmem>>, vector<1x8x128xf32>
    %74 = vector.shape_cast %73 : vector<1x8x128xf32> to vector<8x128xf32>
    %c1_41 = arith.constant 1 : index
    %c0_42 = arith.constant 0 : index
    %c0_43 = arith.constant 0 : index
    %75 = vector.load %arg4[%c1_41, %c0_42, %c0_43] : memref<2x8x128xf32, #tpu.memory_space<vmem>>, vector<1x8x128xf32>
    %76 = vector.shape_cast %75 : vector<1x8x128xf32> to vector<8x128xf32>
    %c1_44 = arith.constant 1 : index
    %77 = memref.load %arg1[%c1_44] : memref<2xf32, #tpu.memory_space<smem>>
    %78 = vector.broadcast %77 : f32 to vector<8x128xf32>
    %79 = arith.mulf %74, %78 : vector<8x128xf32>
    %cst_45 = arith.constant 1.000000e-01 : f32
    %cst_46 = arith.constant 8.000000e+01 : f32
    %80 = vector.broadcast %cst_45 : f32 to vector<8x128xf32>
    %81 = arith.maximumf %80, %79 : vector<8x128xf32>
    %82 = vector.broadcast %cst_46 : f32 to vector<8x128xf32>
    %83 = arith.minimumf %82, %81 : vector<8x128xf32>
    %cst_47 = arith.constant 5.000000e-01 : f32
    %84 = vector.broadcast %cst_47 : f32 to vector<8x128xf32>
    %85 = arith.cmpf ogt, %76, %84 : vector<8x128xf32>
    %cst_48 = arith.constant 1.000000e+00 : f32
    %86 = vector.broadcast %cst_48 : f32 to vector<8x128xf32>
    %87 = arith.select %85, %72, %86 : vector<8x128xi1>, vector<8x128xf32>
    %cst_49 = arith.constant 1.000000e+00 : f32
    %88 = vector.broadcast %cst_49 : f32 to vector<8x128xf32>
    %89 = arith.select %85, %83, %88 : vector<8x128xi1>, vector<8x128xf32>
    %cst_50 = arith.constant 1.000000e+00 : f32
    %90 = vector.broadcast %cst_50 : f32 to vector<8x128xf32>
    %91 = arith.divf %90, %87 : vector<8x128xf32>
    %cst_51 = arith.constant 1.000000e+00 : f32
    %92 = vector.broadcast %cst_51 : f32 to vector<8x128xf32>
    %93 = arith.divf %92, %89 : vector<8x128xf32>
    %94 = arith.mulf %87, %93 : vector<8x128xf32>
    %95 = arith.mulf %89, %91 : vector<8x128xf32>
    %96 = arith.maximumf %94, %95 : vector<8x128xf32>
    %97 = arith.subf %87, %89 : vector<8x128xf32>
    %98 = arith.mulf %97, %97 : vector<8x128xf32>
    %99 = math.log %94 : vector<8x128xf32>
    %100 = math.absf %97 : vector<8x128xf32>
    %101 = arith.mulf %100, %91 : vector<8x128xf32>
    %cst_52 = arith.constant dense<0.000000e+00> : vector<128xf32>
    %102 = vector.multi_reduction <add>, %101, %cst_52 [0] : vector<8x128xf32> to vector<128xf32>
    %103 = vector.shape_cast %102 : vector<128xf32> to vector<1x128xf32>
    %104 = arith.mulf %98, %91 : vector<8x128xf32>
    %cst_53 = arith.constant dense<0.000000e+00> : vector<128xf32>
    %105 = vector.multi_reduction <add>, %104, %cst_53 [0] : vector<8x128xf32> to vector<128xf32>
    %106 = vector.shape_cast %105 : vector<128xf32> to vector<1x128xf32>
    %cst_54 = arith.constant dense<0.000000e+00> : vector<128xf32>
    %107 = vector.multi_reduction <add>, %98, %cst_54 [0] : vector<8x128xf32> to vector<128xf32>
    %108 = vector.shape_cast %107 : vector<128xf32> to vector<1x128xf32>
    %109 = arith.mulf %99, %99 : vector<8x128xf32>
    %cst_55 = arith.constant dense<0.000000e+00> : vector<128xf32>
    %110 = vector.multi_reduction <add>, %109, %cst_55 [0] : vector<8x128xf32> to vector<128xf32>
    %111 = vector.shape_cast %110 : vector<128xf32> to vector<1x128xf32>
    %cst_56 = arith.constant 1.250000e+00 : f32
    %112 = vector.broadcast %cst_56 : f32 to vector<8x128xf32>
    %113 = arith.cmpf olt, %96, %112 : vector<8x128xf32>
    %cst_57 = arith.constant 0.000000e+00 : f32
    %114 = vector.broadcast %cst_57 : f32 to vector<8x128xf32>
    %115 = arith.select %113, %76, %114 : vector<8x128xi1>, vector<8x128xf32>
    %cst_58 = arith.constant dense<0.000000e+00> : vector<128xf32>
    %116 = vector.multi_reduction <add>, %115, %cst_58 [0] : vector<8x128xf32> to vector<128xf32>
    %117 = vector.shape_cast %116 : vector<128xf32> to vector<1x128xf32>
    %cst_59 = arith.constant 1.562500e+00 : f32
    %118 = vector.broadcast %cst_59 : f32 to vector<8x128xf32>
    %119 = arith.cmpf olt, %96, %118 : vector<8x128xf32>
    %cst_60 = arith.constant 0.000000e+00 : f32
    %120 = vector.broadcast %cst_60 : f32 to vector<8x128xf32>
    %121 = arith.select %119, %76, %120 : vector<8x128xi1>, vector<8x128xf32>
    %cst_61 = arith.constant dense<0.000000e+00> : vector<128xf32>
    %122 = vector.multi_reduction <add>, %121, %cst_61 [0] : vector<8x128xf32> to vector<128xf32>
    %123 = vector.shape_cast %122 : vector<128xf32> to vector<1x128xf32>
    %cst_62 = arith.constant 1.953125 : f32
    %124 = vector.broadcast %cst_62 : f32 to vector<8x128xf32>
    %125 = arith.cmpf olt, %96, %124 : vector<8x128xf32>
    %cst_63 = arith.constant 0.000000e+00 : f32
    %126 = vector.broadcast %cst_63 : f32 to vector<8x128xf32>
    %127 = arith.select %125, %76, %126 : vector<8x128xi1>, vector<8x128xf32>
    %cst_64 = arith.constant dense<0.000000e+00> : vector<128xf32>
    %128 = vector.multi_reduction <add>, %127, %cst_64 [0] : vector<8x128xf32> to vector<128xf32>
    %129 = vector.shape_cast %128 : vector<128xf32> to vector<1x128xf32>
    %cst_65 = arith.constant dense<0.000000e+00> : vector<128xf32>
    %130 = vector.multi_reduction <add>, %76, %cst_65 [0] : vector<8x128xf32> to vector<128xf32>
    %131 = vector.shape_cast %130 : vector<128xf32> to vector<1x128xf32>
    %c1_66 = arith.constant 1 : index
    %c0_67 = arith.constant 0 : index
    %c0_68 = arith.constant 0 : index
    %132 = vector.load %arg6[%c1_66, %c0_67, %c0_68] : memref<2x8x128xf32, #tpu.memory_space<vmem>>, vector<1x8x128xf32>
    %133 = vector.shape_cast %132 : vector<1x8x128xf32> to vector<8x128xf32>
    %134 = tpu.concatenate %103, %106, %108, %111, %117, %123, %129, %131 in 0 : vector<1x128xf32>, vector<1x128xf32>, vector<1x128xf32>, vector<1x128xf32>, vector<1x128xf32>, vector<1x128xf32>, vector<1x128xf32>, vector<1x128xf32> -> vector<8x128xf32>
    %135 = arith.addf %133, %134 : vector<8x128xf32>
    %c1_69 = arith.constant 1 : index
    %c0_70 = arith.constant 0 : index
    %c0_71 = arith.constant 0 : index
    %136 = vector.load %arg6[%c1_69, %c0_70, %c0_71] : memref<2x8x128xf32, #tpu.memory_space<vmem>>, vector<1x8x128xf32>
    %137 = vector.shape_cast %136 : vector<1x8x128xf32> to vector<8x128xf32>
    %138 = vector.shape_cast %135 : vector<8x128xf32> to vector<1x8x128xf32>
    tpu.vector_store %arg6[%c1_69, %c0_70, %c0_71], %138 {strides = array<i32>} : memref<2x8x128xf32, #tpu.memory_space<vmem>>, vector<1x8x128xf32>,
    %c0_i32_72 = arith.constant 0 : i32
    %139 = arith.cmpi eq, %arg0, %c0_i32_72 : i32
    %140 = arith.extui %139 : i1 to i32
    %c0_i32_73 = arith.constant 0 : i32
    %141 = arith.cmpi ne, %140, %c0_i32_73 : i32
    scf.if %141 {
      %c0_74 = arith.constant 0 : index
      %c0_75 = arith.constant 0 : index
      %c0_76 = arith.constant 0 : index
      %142 = vector.load %arg6[%c0_74, %c0_75, %c0_76] : memref<2x8x128xf32, #tpu.memory_space<vmem>>, vector<2x8x128xf32>
      %cst_77 = arith.constant dense<0.000000e+00> : vector<2x8xf32>
      %143 = vector.multi_reduction <add>, %142, %cst_77 [2] : vector<2x8x128xf32> to vector<2x8xf32>
      %144 = vector.shape_cast %143 : vector<2x8xf32> to vector<2x8x1xf32>
      %145 = vector.extract_strided_slice %144 {offsets = [0, 7, 0], sizes = [2, 1, 1], strides = [1, 1, 1]} : vector<2x8x1xf32> to vector<2x1x1xf32>
      %cst_78 = arith.constant 1.000000e+00 : f32
      %146 = vector.broadcast %cst_78 : f32 to vector<2x1x1xf32>
      %147 = arith.maximumf %145, %146 : vector<2x1x1xf32>
      %cst_79 = arith.constant 1.000000e+00 : f32
      %148 = vector.broadcast %cst_79 : f32 to vector<2x1x1xf32>
      %149 = arith.divf %148, %147 : vector<2x1x1xf32>
      %150 = vector.broadcast %149 : vector<2x1x1xf32> to vector<2x8x1xf32>
      %151 = arith.mulf %144, %150 : vector<2x8x1xf32>
      %152 = tpu.iota {dimensions = array<i32: 1>} : vector<2x8x1xi32>
      %c2_i32 = arith.constant 2 : i32
      %153 = vector.broadcast %c2_i32 : i32 to vector<2x8x1xi32>
      %154 = arith.cmpi eq, %152, %153 : vector<2x8x1xi32>
      %c3_i32 = arith.constant 3 : i32
      %155 = vector.broadcast %c3_i32 : i32 to vector<2x8x1xi32>
      %156 = arith.cmpi eq, %152, %155 : vector<2x8x1xi32>
      %157 = arith.ori %154, %156 : vector<2x8x1xi1>
      %158 = math.sqrt %151 : vector<2x8x1xf32>
      %159 = arith.select %157, %158, %151 : vector<2x8x1xi1>, vector<2x8x1xf32>
      %cst_80 = arith.constant dense<0.000000e+00> : vector<8x1xf32>
      %160 = vector.multi_reduction <add>, %159, %cst_80 [0] : vector<2x8x1xf32> to vector<8x1xf32>
      %cst_81 = arith.constant 5.000000e-01 : f32
      %161 = vector.broadcast %cst_81 : f32 to vector<8x1xf32>
      %162 = arith.mulf %160, %161 : vector<8x1xf32>
      %163 = vector.shape_cast %162 : vector<8x1xf32> to vector<8x1xf32>
      %164 = vector.broadcast %163 : vector<8x1xf32> to vector<8x128xf32>
      %c0_82 = arith.constant 0 : index
      %c0_83 = arith.constant 0 : index
      %165 = vector.load %arg5[%c0_82, %c0_83] : memref<8x128xf32, #tpu.memory_space<vmem>>, vector<8x128xf32>
      tpu.vector_store %arg5[%c0_82, %c0_83], %164 {strides = array<i32>} : memref<8x128xf32, #tpu.memory_space<vmem>>, vector<8x128xf32>,
    } else {
    }
    return
  }
  func.func @transform_0(%arg0: i32) -> i32 {
    %c0_i32 = arith.constant 0 : i32
    %c0_i32_0 = arith.constant 0 : i32
    return %c0_i32 : i32
  }
  func.func @transform_1(%arg0: i32) -> (i32, i32, i32) {
    %c0_i32 = arith.constant 0 : i32
    %c0_i32_0 = arith.constant 0 : i32
    %c0_i32_1 = arith.constant 0 : i32
    return %c0_i32, %arg0, %c0_i32_0 : i32, i32, i32
  }
  func.func @transform_2(%arg0: i32) -> (i32, i32, i32) {
    %c0_i32 = arith.constant 0 : i32
    %c0_i32_0 = arith.constant 0 : i32
    %c0_i32_1 = arith.constant 0 : i32
    return %c0_i32, %arg0, %c0_i32_0 : i32, i32, i32
  }
  func.func @transform_3(%arg0: i32) -> (i32, i32, i32) {
    %c0_i32 = arith.constant 0 : i32
    %c0_i32_0 = arith.constant 0 : i32
    %c0_i32_1 = arith.constant 0 : i32
    return %c0_i32, %arg0, %c0_i32_0 : i32, i32, i32
  }
  func.func @transform_4(%arg0: i32) -> (i32, i32) {
    %c0_i32 = arith.constant 0 : i32
    %c0_i32_0 = arith.constant 0 : i32
    %c0_i32_1 = arith.constant 0 : i32
    return %c0_i32, %c0_i32_0 : i32, i32
  }
}

</mosaic_0001>

<llo_original>
// kernel: depth_metrics.1
$region0: #{depth_metrics.1}
  #allocation0 [shape = 'u32[]', space=smem, size = 0x4, offset = 0x4, fixed_abs, tag = 'smem constant byte address 0x4 - core index']
  #allocation1 [shape = 'u32[144,128]{1,0:T(1,128)}', space=vmem, size = 0x12000, scoped, tag = 'internal scratch']
  #allocation2 [shape = 'f32[2,8,128]{2,1,0:T(8,128)}', space=vmem, size = 0x2000, scoped, tag = 'scratch operand']
  %s0 = inlined_call_operand.vmem [shape: f32[2], index: 0, kind: input, shape index: {}]
  %s1 = inlined_call_operand.vmem [shape: f32[2,8,128], index: 1, kind: input, shape index: {}]
  %s2 = inlined_call_operand.vmem [shape: f32[2,8,128], index: 2, kind: input, shape index: {}]
  %s3 = inlined_call_operand.vmem [shape: f32[2,8,128], index: 3, kind: input, shape index: {}]
  %s4 = inlined_call_operand.vmem [shape: f32[8,128], index: 4, kind: output, shape index: {}]
  %s5 = sld [smem:[#allocation0]]
  $region38: #{depth_metrics.1} parent=0
    _
  %s7 = ssub.s32 1, %s5
  %s8 = scalar_select 0, %s7, %s5
  $region1: #{depth_metrics.1} parent=0
    #allocation3 [shape = 'u8[512]{0}', space=smem, size = 0x200, scoped, tag = 'input window, operand 0, single buffered']
    #allocation4 [shape = 's32[1]{0}', space=sflag, size = 0x4, scoped, tag = 'scoped memory for depth_metrics.1']
    %9 = vsyncpa [#allocation4], 0
    // Predicated region
    $region2: #{depth_metrics.1} parent=1 // pred_check
      _
    $region3: #{depth_metrics.1} parent=1 // pred_check_branch
      %11 = sbr.rel (0) target = $region5
    $region4: #{depth_metrics.1} parent=1 // pred_region
      %s13 = ssub.s32 16, 16
      %14 = vsyncadd [#allocation4], %s13
      %s16 = sshll.u32 %s0, 4
      %s17 = int_to_ptr.vmem [resolvable:$true] %s16
      %19 = dma.vmem_to_smem %s17, 16, [#allocation3], [#allocation4]
    $region5: #{depth_metrics.1} parent=1 // pred_fallthru
      _
    // Predicated region
    $region6: #{depth_metrics.1} parent=1 // pred_check
      _
    $region7: #{depth_metrics.1} parent=1 // pred_check_branch
      %21 = sbr.rel (0) target = $region9
    $region8: #{depth_metrics.1} parent=1 // pred_region
      _
    $region9: #{depth_metrics.1} parent=1 // pred_fallthru
      _
    // Predicated region
    $region10: #{depth_metrics.1} parent=1 // pred_check
      _
    $region11: #{depth_metrics.1} parent=1 // pred_check_branch
      %23 = sbr.rel (0) target = $region13
    $region12: #{depth_metrics.1} parent=1 // pred_region
      _
    $region13: #{depth_metrics.1} parent=1 // pred_fallthru
      _
    // Predicated region
    $region14: #{depth_metrics.1} parent=1 // pred_check
      _
    $region15: #{depth_metrics.1} parent=1 // pred_check_branch
      %25 = sbr.rel (0) target = $region17
    $region16: #{depth_metrics.1} parent=1 // pred_region
      _
    $region17: #{depth_metrics.1} parent=1 // pred_fallthru
      _
    // Predicated region
    $region18: #{depth_metrics.1} parent=1 // pred_check
      _
    $region19: #{depth_metrics.1} parent=1 // pred_check_branch
      %27 = sbr.rel (0) target = $region21
    $region20: #{depth_metrics.1} parent=1 // pred_region
      %28 = dma.done [#allocation4], 16
    $region21: #{depth_metrics.1} parent=1 // pred_fallthru
      _
    %29 = sfence
    %p30 = scmp.eq.s32.totalorder 0, 0
    // Predicated region
    $region22: #{depth_metrics.1} parent=1 // pred_check
      %p31 = pneg %p30
    $region23: #{depth_metrics.1} parent=1 // pred_check_branch
      %33 = sbr.rel (%p31) target = $region25
    $region24: #{depth_metrics.1} parent=1 // pred_region
      %34 = vst [vmem:[#allocation2] sm:$0xff] 0.0
      %35 = vst [vmem:[#allocation2 + $0x8] sm:$0xff] 0.0
    $region25: #{depth_metrics.1} parent=1 // pred_fallthru
      _
    %v36 = vld [vmem:[%s1] sm:$0xff]
    %v37 = vld [vmem:[%s2] sm:$0xff]
    %v38 = vld [vmem:[%s3] sm:$0xff]
    %s39 = sld [smem:[#allocation3]]
    %v40 = vstv %s39
    %v41 = vmul.f32 %v37, %v40
    %v42 = vmax.f32 %v41, 0.1
    %v43 = vmin.f32 %v42, 80.0
    %vm44 = vcmp.gt.f32.partialorder %v38, 0.5
    %v45 = vsel %vm44, %v36, 1.0
    %v46 = vsel %vm44, %v43, 1.0
    %v47 = vrcp.pop %v45
    %v48 = vmul.f32 1.0, %v47
    %v49 = vrcp.pop %v46
    %v50 = vmul.f32 1.0, %v49
    %v51 = vmul.f32 %v45, %v50
    %v52 = vmul.f32 %v46, %v48
    %v53 = vmax.f32 %v51, %v52
    %v54 = vsub.f32 %v45, %v46
    %v55 = vmul.f32 %v54, %v54
    %v56 = vlog2.pop %v51
    %v57 = vmul.f32 %v56, 0.6931472
    %v58 = vand.u32 2147483647, %v54
    %v59 = vmul.f32 %v58, %v48
    %v60 = vrot.slane %v59, 4
    %v61 = vadd.f32 %v59, %v60
    %v62 = vrot.slane %v61, 2
    %v63 = vadd.f32 %v61, %v62
    %v64 = vrot.slane %v63, 1
    %v65 = vadd.f32 %v63, %v64
    %v66 = vmul.f32 %v55, %v48
    %v67 = vrot.slane %v66, 4
    %v68 = vadd.f32 %v66, %v67
    %v69 = vrot.slane %v68, 2
    %v70 = vadd.f32 %v68, %v69
    %v71 = vrot.slane %v70, 1
    %v72 = vadd.f32 %v70, %v71
    %v73 = vrot.slane %v55, 4
    %v74 = vadd.f32 %v55, %v73
    %v75 = vrot.slane %v74, 2
    %v76 = vadd.f32 %v74, %v75
    %v77 = vrot.slane %v76, 1
    %v78 = vadd.f32 %v76, %v77
    %v79 = vmul.f32 %v57, %v57
    %v80 = vrot.slane %v79, 4
    %v81 = vadd.f32 %v79, %v80
    %v82 = vrot.slane %v81, 2
    %v83 = vadd.f32 %v81, %v82
    %v84 = vrot.slane %v83, 1
    %v85 = vadd.f32 %v83, %v84
    %vm86 = vcmp.lt.f32.partialorder %v53, 1.25
    %v87 = vsel %vm86, %v38, 0.0
    %v88 = vrot.slane %v87, 4
    %v89 = vadd.f32 %v87, %v88
    %v90 = vrot.slane %v89, 2
    %v91 = vadd.f32 %v89, %v90
    %v92 = vrot.slane %v91, 1
    %v93 = vadd.f32 %v91, %v92
    %vm94 = vcmp.lt.f32.partialorder %v53, 1.5625
    %v95 = vsel %vm94, %v38, 0.0
    %v96 = vrot.slane %v95, 4
    %v97 = vadd.f32 %v95, %v96
    %v98 = vrot.slane %v97, 2
    %v99 = vadd.f32 %v97, %v98
    %v100 = vrot.slane %v99, 1
    %v101 = vadd.f32 %v99, %v100
    %vm102 = vcmp.lt.f32.partialorder %v53, 1.953125
    %v103 = vsel %vm102, %v38, 0.0
    %v104 = vrot.slane %v103, 4
    %v105 = vadd.f32 %v103, %v104
    %v106 = vrot.slane %v105, 2
    %v107 = vadd.f32 %v105, %v106
    %v108 = vrot.slane %v107, 1
    %v109 = vadd.f32 %v107, %v108
    %v110 = vrot.slane %v38, 4
    %v111 = vadd.f32 %v38, %v110
    %v112 = vrot.slane %v111, 2
    %v113 = vadd.f32 %v111, %v112
    %v114 = vrot.slane %v113, 1
    %v115 = vadd.f32 %v113, %v114
    %v116 = vld [vmem:[#allocation2] sm:$0xff]
    %vm117 = vcmask 1040384
    %v118 = vsel %vm117, %v65, %v72
    %vm119 = vcmask 1041408
    %v120 = vsel %vm119, %v118, %v78
    %vm121 = vcmask 1042432
    %v122 = vsel %vm121, %v120, %v85
    %vm123 = vcmask 1043456
    %v124 = vsel %vm123, %v122, %v93
    %vm125 = vcmask 1044480
    %v126 = vsel %vm125, %v124, %v101
    %vm127 = vcmask 1045504
    %v128 = vsel %vm127, %v126, %v109
    %vm129 = vcmask 1046528
    %v130 = vsel %vm129, %v128, %v115
    %v131 = vadd.f32 %v116, %v130
    %132 = vst [vmem:[#allocation2] sm:$0xff] %v131
    %s133 = scalar_lea.vmem %s1, 8
    %v134 = vld [vmem:[%s133] sm:$0xff]
    %s135 = scalar_lea.vmem %s2, 8
    %v136 = vld [vmem:[%s135] sm:$0xff]
    %s137 = scalar_lea.vmem %s3, 8
    %v138 = vld [vmem:[%s137] sm:$0xff]
    %s139 = sld [smem:[#allocation3 + $0x1]]
    %v140 = vstv %s139
    %v141 = vmul.f32 %v136, %v140
    %v142 = vmax.f32 %v141, 0.1
    %v143 = vmin.f32 %v142, 80.0
    %vm144 = vcmp.gt.f32.partialorder %v138, 0.5
    %v145 = vsel %vm144, %v134, 1.0
    %v146 = vsel %vm144, %v143, 1.0
    %v147 = vrcp.pop %v145
    %v148 = vmul.f32 1.0, %v147
    %v149 = vrcp.pop %v146
    %v150 = vmul.f32 1.0, %v149
    %v151 = vmul.f32 %v145, %v150
    %v152 = vmul.f32 %v146, %v148
    %v153 = vmax.f32 %v151, %v152
    %v154 = vsub.f32 %v145, %v146
    %v155 = vmul.f32 %v154, %v154
    %v156 = vlog2.pop %v151
    %v157 = vmul.f32 %v156, 0.6931472
    %v158 = vand.u32 2147483647, %v154
    %v159 = vmul.f32 %v158, %v148
    %v160 = vrot.slane %v159, 4
    %v161 = vadd.f32 %v159, %v160
    %v162 = vrot.slane %v161, 2
    %v163 = vadd.f32 %v161, %v162
    %v164 = vrot.slane %v163, 1
    %v165 = vadd.f32 %v163, %v164
    %v166 = vmul.f32 %v155, %v148
    %v167 = vrot.slane %v166, 4
    %v168 = vadd.f32 %v166, %v167
    %v169 = vrot.slane %v168, 2
    %v170 = vadd.f32 %v168, %v169
    %v171 = vrot.slane %v170, 1
    %v172 = vadd.f32 %v170, %v171
    %v173 = vrot.slane %v155, 4
    %v174 = vadd.f32 %v155, %v173
    %v175 = vrot.slane %v174, 2
    %v176 = vadd.f32 %v174, %v175
    %v177 = vrot.slane %v176, 1
    %v178 = vadd.f32 %v176, %v177
    %v179 = vmul.f32 %v157, %v157
    %v180 = vrot.slane %v179, 4
    %v181 = vadd.f32 %v179, %v180
    %v182 = vrot.slane %v181, 2
    %v183 = vadd.f32 %v181, %v182
    %v184 = vrot.slane %v183, 1
    %v185 = vadd.f32 %v183, %v184
    %vm186 = vcmp.lt.f32.partialorder %v153, 1.25
    %v187 = vsel %vm186, %v138, 0.0
    %v188 = vrot.slane %v187, 4
    %v189 = vadd.f32 %v187, %v188
    %v190 = vrot.slane %v189, 2
    %v191 = vadd.f32 %v189, %v190
    %v192 = vrot.slane %v191, 1
    %v193 = vadd.f32 %v191, %v192
    %vm194 = vcmp.lt.f32.partialorder %v153, 1.5625
    %v195 = vsel %vm194, %v138, 0.0
    %v196 = vrot.slane %v195, 4
    %v197 = vadd.f32 %v195, %v196
    %v198 = vrot.slane %v197, 2
    %v199 = vadd.f32 %v197, %v198
    %v200 = vrot.slane %v199, 1
    %v201 = vadd.f32 %v199, %v200
    %vm202 = vcmp.lt.f32.partialorder %v153, 1.953125
    %v203 = vsel %vm202, %v138, 0.0
    %v204 = vrot.slane %v203, 4
    %v205 = vadd.f32 %v203, %v204
    %v206 = vrot.slane %v205, 2
    %v207 = vadd.f32 %v205, %v206
    %v208 = vrot.slane %v207, 1
    %v209 = vadd.f32 %v207, %v208
    %v210 = vrot.slane %v138, 4
    %v211 = vadd.f32 %v138, %v210
    %v212 = vrot.slane %v211, 2
    %v213 = vadd.f32 %v211, %v212
    %v214 = vrot.slane %v213, 1
    %v215 = vadd.f32 %v213, %v214
    %s216 = scalar_lea.vmem [#allocation2], 8
    %v217 = vld [vmem:[%s216] sm:$0xff]
    %v218 = vsel %vm117, %v165, %v172
    %v219 = vsel %vm119, %v218, %v178
    %v220 = vsel %vm121, %v219, %v185
    %v221 = vsel %vm123, %v220, %v193
    %v222 = vsel %vm125, %v221, %v201
    %v223 = vsel %vm127, %v222, %v209
    %v224 = vsel %vm129, %v223, %v215
    %v225 = vadd.f32 %v217, %v224
    %226 = vst [vmem:[%s216] sm:$0xff] %v225
    // Predicated region
    $region26: #{depth_metrics.1} parent=1 // pred_check
      %p227 = pneg %p30
    $region27: #{depth_metrics.1} parent=1 // pred_check_branch
      %229 = sbr.rel (%p227) target = $region29
    $region28: #{depth_metrics.1} parent=1 // pred_region
      %v230 = vld [vmem:[#allocation2] sm:$0xff]
      %v231 = vld [vmem:[#allocation2 + $0x8] sm:$0xff]
      %232 = vadd.xlane.f32.xlu0 %v230
      %v233 = vpop.xlane.xlu0 %232
      %234 = vadd.xlane.f32.xlu0 %v231
      %v235 = vpop.xlane.xlu0 %234
      %v236 = vmax.f32 %v233, 1.0
      %v237 = vmax.f32 %v235, 1.0
      %v238 = vrcp.pop %v236
      %v239 = vmul.f32 1.0, %v238
      %v240 = vrcp.pop %v237
      %v241 = vmul.f32 1.0, %v240
      %v242 = vlaneseq
      %v243 = vshrl.u32 %v242, 7
      %v244 = vsub.s32 7, %v243
      %v245 = vrot.slane %v239, %v244
      %v246 = vlaneseq
      %v247 = vshrl.u32 %v246, 7
      %v248 = vsub.s32 7, %v247
      %v249 = vrot.slane %v241, %v248
      %v250 = vmul.f32 %v233, %v245
      %v251 = vmul.f32 %v235, %v249
      %v252 = vlaneseq
      %v253 = vshrl.u32 %v252, 7
      %vm254 = vcmp.eq.s32.totalorder %v253, 2
      %vm255 = vcmp.eq.s32.totalorder %v253, 3
      %vm256 = vmor %vm254, %vm255
      %v257 = vrsqrt.pop %v250
      %v258 = vmul.f32 %v250, %v257
      %vm259 = vcmp.eq.f32.partialorder %v250, inf
      %v260 = vsel %vm259, %v250, %v258
      %vm261 = vcmp.eq.f32.partialorder %v250, 0.0
      %v262 = vand.u32 %v250, 2147483648
      %v263 = vsel %vm261, %v262, %v260
      %v264 = vrsqrt.pop %v251
      %v265 = vmul.f32 %v251, %v264
      %vm266 = vcmp.eq.f32.partialorder %v251, inf
      %v267 = vsel %vm266, %v251, %v265
      %vm268 = vcmp.eq.f32.partialorder %v251, 0.0
      %v269 = vand.u32 %v251, 2147483648
      %v270 = vsel %vm268, %v269, %v267
      %v271 = vsel %vm256, %v263, %v250
      %v272 = vsel %vm256, %v270, %v251
      %v273 = vadd.f32 %v271, %v272
      %v274 = vmul.f32 %v273, 0.5
      %275 = vst [vmem:[%s4] sm:$0xff] %v274
    $region29: #{depth_metrics.1} parent=1 // pred_fallthru
      _
    // Predicated region
    $region30: #{depth_metrics.1} parent=1 // pred_check
      _
    $region31: #{depth_metrics.1} parent=1 // pred_check_branch
      %277 = sbr.rel (0) target = $region33
    $region32: #{depth_metrics.1} parent=1 // pred_region
      _
    $region33: #{depth_metrics.1} parent=1 // pred_fallthru
      _
    // Predicated region
    $region34: #{depth_metrics.1} parent=1 // pred_check
      _
    $region35: #{depth_metrics.1} parent=1 // pred_check_branch
      %279 = sbr.rel (0) target = $region37
    $region36: #{depth_metrics.1} parent=1 // pred_region
      _
    $region37: #{depth_metrics.1} parent=1 // pred_fallthru
      _
    %280 = vsyncpa [#allocation4], 1

</llo_original>
